<compile_context>
chip_gen: v7x
topology: tpu7x:2x2x1
jax: 0.10.0
libtpu: 0.0.40
codegen_flags: <defaults>
</compile_context>

<pallas_src>
import functools

import jax
import jax.numpy as jnp
from jax.experimental import pallas as pl
from jax.experimental.pallas import tpu as pltpu

# emb_type / cls_type constants (mirror train.py)
FF = 0
POOLER = 0
CLS = 1
EMB_MEAN = 2
EMB_MAX = 3
EMB_MIN = 4

_VMEM_LIMIT_BYTES = 64 * 1024 * 1024  # legal on v5e/v6e/v7x; tiles use far less


def _choose_tile(dim, preferred, align):
    """Largest divisor of `dim` that is <= preferred and a multiple of `align`.

    Falls back to the full dim (always a legal, exactly-covering block).
    Returning only exact divisors keeps tiled reductions free of padded junk.
    """
    if dim <= preferred:
        return dim
    t = (preferred // align) * align
    while t >= align:
        if dim % t == 0:
            return t
        t -= align
    return dim


def _cls_head_kernel(hs_ref, w_ref, b_ref, out_ref):
    """CLS pooling: take row 0 of each sequence, multiply by w, reduce over H.

    hs_ref : [TB, s_blk, H]  (only the first seq rows of each sequence are DMA'd)
    w_ref  : [1, H]          cls_layer weight (torch layout)
    b_ref  : [1, 1]          cls_layer bias
    out_ref: [TB, 1]         logits
    """
    emb = hs_ref[:, 0, :].astype(jnp.float32)                    # (TB, H)
    # dropout is identity in eval mode
    out_ref[...] = (
        jnp.sum(emb * w_ref[...], axis=-1, keepdims=True) + b_ref[...]
    ).astype(out_ref.dtype)


def _pooled_head_kernel(hs_ref, w_ref, b_ref, out_ref, acc_ref, *,
                        emb_type, seq_len):
    """Tiled seq pooling (mean/max/min) + Linear(H, 1), weight folded in.

    hs_ref : [TB, TS, H]  bf16/f32 tile of last_hidden_states
    w_ref  : [1, H]       cls_layer weight (torch layout)
    b_ref  : [1, 1]       cls_layer bias
    out_ref: [TB, 1]      logits (written at the last S step)
    acc_ref: [TB, 1] f32 (mean) or [TB, H] f32 (max/min) accumulator scratch
    """
    s = pl.program_id(1)
    n_s = pl.num_programs(1)

    @pl.when(s == 0)
    def _init():
        if emb_type == EMB_MEAN:
            acc_ref[...] = jnp.zeros_like(acc_ref)
        elif emb_type == EMB_MAX:
            acc_ref[...] = jnp.full_like(acc_ref, -jnp.inf)
        else:  # EMB_MIN
            acc_ref[...] = jnp.full_like(acc_ref, jnp.inf)

    hs = hs_ref[...].astype(jnp.float32)                         # per-tile upcast

    if emb_type == EMB_MEAN:
        # Fold the [1, H] weight into the reduction -> accumulator is [TB, 1].
        seq_sum = jnp.sum(hs, axis=1)                            # (TB, H)
        acc_ref[...] += jnp.sum(seq_sum * w_ref[...], axis=-1, keepdims=True)
    elif emb_type == EMB_MAX:
        acc_ref[...] = jnp.maximum(acc_ref[...], jnp.max(hs, axis=1))
    else:  # EMB_MIN
        acc_ref[...] = jnp.minimum(acc_ref[...], jnp.min(hs, axis=1))

    @pl.when(s == n_s - 1)
    def _finalize():
        # dropout is identity in eval mode
        if emb_type == EMB_MEAN:
            out_ref[...] = (
                acc_ref[...] * (1.0 / seq_len) + b_ref[...]
            ).astype(out_ref.dtype)
        else:
            emb = acc_ref[...]                                   # (TB, H)
            out_ref[...] = (
                jnp.sum(emb * w_ref[...], axis=-1, keepdims=True) + b_ref[...]
            ).astype(out_ref.dtype)


def classifier_head(last_hidden_states, cls_w, cls_b, *, emb_type=EMB_MEAN,
                    tb=8, ts=512):
    """Pallas wrapper: pooling + Linear(H, 1) classifier head.

    last_hidden_states: [B, S, H] bf16 or f32
    cls_w:              [1, H] (torch nn.Linear weight layout) or [H, 1]
    cls_b:              scalar-like bias
    returns logits:     [B, 1] float32
    """
    B, S, H = last_hidden_states.shape
    cls_w = jnp.asarray(cls_w, dtype=jnp.float32).reshape(1, H)
    cls_b = jnp.asarray(cls_b, dtype=jnp.float32).reshape(1, 1)

    itemsize = jnp.dtype(last_hidden_states.dtype).itemsize
    TB = _choose_tile(B, tb, 8)  # output block second-minor: multiple of 8 or full B

    if emb_type == CLS:
        # Only DMA the first (<=8) seq rows of each sequence — avoids the S×
        # HBM overfetch of loading the full [B, S, H] tensor.
        s_blk = S if S <= 8 else 8
        cost = pl.CostEstimate(
            flops=2 * B * H,
            transcendentals=0,
            bytes_accessed=B * s_blk * H * itemsize + H * 4 + 4 + B * 4,
        )
        return pl.pallas_call(
            _cls_head_kernel,
            out_shape=jax.ShapeDtypeStruct((B, 1), jnp.float32),
            grid=(B // TB,),
            in_specs=[
                pl.BlockSpec((TB, s_blk, H), lambda b: (b, 0, 0)),
                pl.BlockSpec((1, H), lambda b: (0, 0)),
                pl.BlockSpec((1, 1), lambda b: (0, 0)),
            ],
            out_specs=pl.BlockSpec((TB, 1), lambda b: (b, 0)),
            compiler_params=pltpu.CompilerParams(
                dimension_semantics=("parallel",),
                vmem_limit_bytes=_VMEM_LIMIT_BYTES,
            ),
            cost_estimate=cost,
        )(last_hidden_states, cls_w, cls_b)

    if emb_type not in (EMB_MEAN, EMB_MAX, EMB_MIN):
        # TODO(synk): POOLER output needs the backbone's pooler head (external).
        raise ValueError(f"unsupported emb_type for this kernel: {emb_type}")

    # S tile: big enough to amortize per-step pipeline overhead, small enough
    # that 2x(TB*TS*H*itemsize) double-buffered stays well under v7x's 64 MiB.
    TS = _choose_tile(S, ts, 8)
    acc_shape = (TB, 1) if emb_type == EMB_MEAN else (TB, H)
    kernel = functools.partial(_pooled_head_kernel, emb_type=emb_type, seq_len=S)
    cost = pl.CostEstimate(
        flops=B * S * H + 2 * B * H,
        transcendentals=0,
        bytes_accessed=B * S * H * itemsize + H * 4 + 4 + B * 4,
    )
    return pl.pallas_call(
        kernel,
        out_shape=jax.ShapeDtypeStruct((B, 1), jnp.float32),
        grid=(B // TB, S // TS),
        in_specs=[
            pl.BlockSpec((TB, TS, H), lambda b, s: (b, s, 0)),
            pl.BlockSpec((1, H), lambda b, s: (0, 0)),
            pl.BlockSpec((1, 1), lambda b, s: (0, 0)),
        ],
        out_specs=pl.BlockSpec((TB, 1), lambda b, s: (b, 0)),
        scratch_shapes=[pltpu.VMEM(acc_shape, jnp.float32)],
        compiler_params=pltpu.CompilerParams(
            dimension_semantics=("parallel", "arbitrary"),
            vmem_limit_bytes=_VMEM_LIMIT_BYTES,
        ),
        cost_estimate=cost,
    )(last_hidden_states, cls_w, cls_b)


def synthetic_llm(input_ids, attn_masks, emb_table):
    """Deterministic stand-in for the pretrained LLM backbone (plain-JAX glue).

    Produces last_hidden_states [B, S, H] via an embedding lookup, zeroing
    padded positions with attn_masks (purely so the mask participates).
    """
    # TODO(synk): pretrained Electra/AutoModel backbone has no Pallas equivalent;
    # replaced by a synthetic embedding lookup.
    hs = emb_table[input_ids]                               # (B, S, H)
    return hs * attn_masks[..., None].astype(hs.dtype)


def _reference_head(hs_f32, cls_w, cls_b, emb_type):
    """Pure-JAX reference of pooling + linear, for a correctness check."""
    if emb_type == CLS:
        emb = hs_f32[:, 0, :]
    elif emb_type == EMB_MEAN:
        emb = hs_f32.mean(axis=1)
    elif emb_type == EMB_MAX:
        emb = hs_f32.max(axis=1)
    elif emb_type == EMB_MIN:
        emb = hs_f32.min(axis=1)
    w = jnp.asarray(cls_w, jnp.float32).reshape(1, -1)
    b = jnp.asarray(cls_b, jnp.float32).reshape(1, 1)
    return emb @ w.T + b


if __name__ == "__main__":
    # Small shapes consistent with the module's forward
    B, S, H = 2, 8, 32          # batch, seq_len, hidden_size
    VOCAB = 100

    key = jax.random.PRNGKey(0)
    k_emb, k_ids, k_w, k_b = jax.random.split(key, 4)

    # Deterministic parameter / input init
    emb_table = jax.random.normal(k_emb, (VOCAB, H), dtype=jnp.float32) * 0.02
    input_ids = jax.random.randint(k_ids, (B, S), 0, VOCAB, dtype=jnp.int32)
    attn_masks = jnp.ones((B, S), dtype=jnp.int32)

    # nn.Linear(hidden_size, 1): weight [1, H], bias [1]
    cls_w = jax.random.normal(k_w, (1, H), dtype=jnp.float32) * 0.02
    cls_b = jax.random.normal(k_b, (1,), dtype=jnp.float32)

    # "LLM" backbone (glue); keep activations bf16 (autocast-style) — the
    # kernel accumulates in f32 per tile.
    last_hidden_states = synthetic_llm(input_ids, attn_masks, emb_table)
    last_hidden_states = last_hidden_states.astype(jnp.bfloat16)
    hs_f32 = last_hidden_states.astype(jnp.float32)

    # NOTE: max/min/mean pooling include padded positions exactly as the
    # original module does (it never masks the pooling either).
    for emb_type in (CLS, EMB_MEAN, EMB_MAX, EMB_MIN):
        logits = classifier_head(last_hidden_states, cls_w, cls_b,
                                 emb_type=emb_type)
        logits = jax.block_until_ready(logits)
        ref = _reference_head(hs_f32, cls_w, cls_b, emb_type)
        assert logits.shape == (B, 1), (emb_type, logits.shape)
        assert jnp.allclose(logits, ref, atol=1e-3, rtol=1e-3), \
            (emb_type, logits, ref)

    print("KERNEL_OK")
</pallas_src>

<mosaic_0001>
module attributes {stable_mosaic.version = 11 : i64} {
  func.func @_cls_head_kernel(%arg0: i32, %arg1: memref<2x8x32xbf16, #tpu.memory_space<vmem>>, %arg2: memref<1x32xf32, #tpu.memory_space<vmem>>, %arg3: memref<1x1xf32, #tpu.memory_space<vmem>>, %arg4: memref<2x1xf32, #tpu.memory_space<vmem>>) attributes {dimension_semantics = [#tpu.dimension_semantics<parallel>], iteration_bounds = array<i64: 1>, scalar_prefetch = 0 : i64, scratch_operands = 0 : i64, tpu.core_type = #tpu.core_type<tc>, window_params = [{transform_indices = @transform_0, window_bounds = array<i64: 2, 8, 32>}, {pipeline_mode = #tpu.pipeline_mode<synchronous>, transform_indices = @transform_1, window_bounds = array<i64: 1, 32>}, {pipeline_mode = #tpu.pipeline_mode<synchronous>, transform_indices = @transform_2, window_bounds = array<i64: 1, 1>}, {transform_indices = @transform_3, window_bounds = array<i64: 2, 1>}]} {
    %c0 = arith.constant 0 : index
    %c0_0 = arith.constant 0 : index
    %c0_1 = arith.constant 0 : index
    %0 = vector.load %arg1[%c0, %c0_0, %c0_1] : memref<2x8x32xbf16, #tpu.memory_space<vmem>>, vector<2x1x32xbf16>
    %1 = vector.shape_cast %0 : vector<2x1x32xbf16> to vector<2x32xbf16>
    %2 = arith.extf %1 : vector<2x32xbf16> to vector<2x32xf32>
    %c0_2 = arith.constant 0 : index
    %c0_3 = arith.constant 0 : index
    %3 = vector.load %arg2[%c0_2, %c0_3] : memref<1x32xf32, #tpu.memory_space<vmem>>, vector<1x32xf32>
    %4 = vector.broadcast %3 : vector<1x32xf32> to vector<2x32xf32>
    %5 = arith.mulf %2, %4 : vector<2x32xf32>
    %cst = arith.constant dense<0.000000e+00> : vector<2xf32>
    %6 = vector.multi_reduction <add>, %5, %cst [1] : vector<2x32xf32> to vector<2xf32>
    %7 = vector.shape_cast %6 : vector<2xf32> to vector<2x1xf32>
    %c0_4 = arith.constant 0 : index
    %c0_5 = arith.constant 0 : index
    %8 = vector.load %arg3[%c0_4, %c0_5] : memref<1x1xf32, #tpu.memory_space<vmem>>, vector<1x1xf32>
    %9 = vector.broadcast %8 : vector<1x1xf32> to vector<2x1xf32>
    %10 = arith.addf %7, %9 : vector<2x1xf32>
    %c0_6 = arith.constant 0 : index
    %c0_7 = arith.constant 0 : index
    %11 = vector.load %arg4[%c0_6, %c0_7] : memref<2x1xf32, #tpu.memory_space<vmem>>, vector<2x1xf32>
    tpu.vector_store %arg4[%c0_6, %c0_7], %10 {strides = array<i32>} : memref<2x1xf32, #tpu.memory_space<vmem>>, vector<2x1xf32>,
    return
  }
  func.func @transform_0(%arg0: i32) -> (i32, i32, i32) {
    %c0_i32 = arith.constant 0 : i32
    %c0_i32_0 = arith.constant 0 : i32
    %c0_i32_1 = arith.constant 0 : i32
    return %arg0, %c0_i32, %c0_i32_0 : i32, i32, i32
  }
  func.func @transform_1(%arg0: i32) -> (i32, i32) {
    %c0_i32 = arith.constant 0 : i32
    %c0_i32_0 = arith.constant 0 : i32
    %c0_i32_1 = arith.constant 0 : i32
    return %c0_i32, %c0_i32_0 : i32, i32
  }
  func.func @transform_2(%arg0: i32) -> (i32, i32) {
    %c0_i32 = arith.constant 0 : i32
    %c0_i32_0 = arith.constant 0 : i32
    %c0_i32_1 = arith.constant 0 : i32
    return %c0_i32, %c0_i32_0 : i32, i32
  }
  func.func @transform_3(%arg0: i32) -> (i32, i32) {
    %c0_i32 = arith.constant 0 : i32
    %c0_i32_0 = arith.constant 0 : i32
    return %arg0, %c0_i32 : i32, i32
  }
}

</mosaic_0001>

<llo_original>
// kernel: tpu_custom_call.1
$region0: #{tpu_custom_call.1}
  #allocation0 [shape = 'u32[]', space=smem, size = 0x4, offset = 0x4, fixed_abs, tag = 'smem constant byte address 0x4 - core index']
  #allocation1 [shape = 'u32[144,128]{1,0:T(1,128)}', space=vmem, size = 0x12000, scoped, tag = 'internal scratch']
  #allocation2 [shape = 'f32[1,1]{1,0:T(1,128)S(1)}', space=vmem, size = 0x200, scoped, tag = 'scoped memory for tpu_custom_call.1']
  %s0 = inlined_call_operand.hbm [shape: bf16[2,8,32], index: 0, kind: input, shape index: {}]
  %s1 = inlined_call_operand.hbm [shape: f32[1,32], index: 1, kind: input, shape index: {}]
  %s2 = inlined_call_operand.<no memory space> [shape: f32[1,1], index: 2, kind: input, shape index: {}]
  %s3 = inlined_call_operand.hbm [shape: f32[2,1], index: 3, kind: output, shape index: {}]
  %s4 = sld [smem:[#allocation0]]
  $region30: #{tpu_custom_call.1} parent=0
    _
  %s6 = ssub.s32 1, %s4
  %s7 = scalar_select 0, %s6, %s4
  %v8 = vstv %s2
  %9 = vst [vmem:[#allocation2] sm:$0x1] %v8
  $region1: #{tpu_custom_call.1} parent=0
    #allocation3 [shape = 'u8[4096]{0}', space=vmem, size = 0x1000, scoped, tag = 'input window, operand 0, single buffered']
    #allocation4 [shape = 's32[1]{0}', space=sflag, size = 0x4, scoped, tag = 'scoped memory for tpu_custom_call.1']
    #allocation5 [shape = 's32[1]{0}', space=sflag, size = 0x4, scoped, tag = 'scoped memory for tpu_custom_call.1']
    #allocation6 [shape = 'u8[512]{0}', space=vmem, size = 0x400, scoped, tag = 'input window, operand 1, single buffered']
    #allocation7 [shape = 's32[1]{0}', space=sflag, size = 0x4, scoped, tag = 'scoped memory for tpu_custom_call.1']
    #allocation8 [shape = 'u8[1024]{0}', space=vmem, size = 0x400, scoped, tag = 'output window, operand 0, single buffered']
    %10 = vsyncpa [#allocation4], 0
    %11 = vsyncpa [#allocation7], 0
    %12 = vsyncpa [#allocation5], 0
    // Predicated region
    $region2: #{tpu_custom_call.1} parent=1 // pred_check
      _
    $region3: #{tpu_custom_call.1} parent=1 // pred_check_branch
      %14 = sbr.rel (0) target = $region5
    $region4: #{tpu_custom_call.1} parent=1 // pred_region
      %s16 = ssub.s32 128, 128
      %17 = vsyncadd [#allocation4], %s16
      %s18 = sshll.u32 [#allocation3], 4
      %s19 = int_to_ptr.vmem [resolvable:$true] %s18
      %24 = dma.hbm_to_vmem [thread:$0]  %s0, 128, %s19, [#allocation4], 64, 64, 4
    $region5: #{tpu_custom_call.1} parent=1 // pred_fallthru
      _
    // Predicated region
    $region6: #{tpu_custom_call.1} parent=1 // pred_check
      _
    $region7: #{tpu_custom_call.1} parent=1 // pred_check_branch
      %26 = sbr.rel (0) target = $region9
    $region8: #{tpu_custom_call.1} parent=1 // pred_region
      %s28 = ssub.s32 16, 16
      %29 = vsyncadd [#allocation7], %s28
      %s31 = sshll.u32 [#allocation6], 4
      %s32 = int_to_ptr.vmem [resolvable:$true] %s31
      %34 = dma.hbm_to_vmem [thread:$0]  %s1, 16, %s32, [#allocation7]
    $region9: #{tpu_custom_call.1} parent=1 // pred_fallthru
      _
    // Predicated region
    $region10: #{tpu_custom_call.1} parent=1 // pred_check
      _
    $region11: #{tpu_custom_call.1} parent=1 // pred_check_branch
      %36 = sbr.rel (0) target = $region13
    $region12: #{tpu_custom_call.1} parent=1 // pred_region
      _
    $region13: #{tpu_custom_call.1} parent=1 // pred_fallthru
      _
    // Predicated region
    $region14: #{tpu_custom_call.1} parent=1 // pred_check
      _
    $region15: #{tpu_custom_call.1} parent=1 // pred_check_branch
      %38 = sbr.rel (0) target = $region17
    $region16: #{tpu_custom_call.1} parent=1 // pred_region
      %39 = dma.done [#allocation4], 128
    $region17: #{tpu_custom_call.1} parent=1 // pred_fallthru
      _
    // Predicated region
    $region18: #{tpu_custom_call.1} parent=1 // pred_check
      _
    $region19: #{tpu_custom_call.1} parent=1 // pred_check_branch
      %41 = sbr.rel (0) target = $region21
    $region20: #{tpu_custom_call.1} parent=1 // pred_region
      %42 = dma.done [#allocation7], 16
    $region21: #{tpu_custom_call.1} parent=1 // pred_fallthru
      _
    %v43 = vld [vmem:[#allocation3] sm:$0x1]
    %v44 = vld [vmem:[#allocation3 + $0x4] sm:$0x1]
    %v45 = vunpack.c.l.bf16 %v43
    %v46 = vunpack.c.l.bf16 %v44
    %v47 = vld [vmem:[#allocation6] sm:$0x1]
    %v49 = vlaneseq
    %v50 = vshrl.u32 %v49, 7
    %v51 = vsub.s32 0, %v50
    %v52 = vrot.slane %v47, %v51
    %v54 = vmul.f32 %v45, %v52
    %v55 = vmul.f32 %v46, %v52
    %v58 = vrot.slane %v55, 7
    %vm59 = vcmask 1041409
    %v60 = vsel %vm59, %v58, %v54
    %vm62 = vcmask 254976
    %v63 = vsel %vm62, %v60, 0.0
    %64 = vadd.xlane.f32.xlu0 %v63
    %v65 = vpop.xlane.xlu0 %64
    %v66 = vld [vmem:[#allocation2] sm:$0x1]
    %v68 = vlaneseq
    %v69 = vshrl.u32 %v68, 7
    %v70 = vsub.s32 0, %v69
    %v71 = vrot.slane %v66, %v70
    %v73 = vadd.f32 %v65, %v71
    %vm74 = vcmask 1024
    %75 = vst.msk [vmem:[#allocation8] sm:$0x3] %vm74, %v73
    // Predicated region
    $region22: #{tpu_custom_call.1} parent=1 // pred_check
      _
    $region23: #{tpu_custom_call.1} parent=1 // pred_check_branch
      %77 = sbr.rel (0) target = $region25
    $region24: #{tpu_custom_call.1} parent=1 // pred_region
      %s79 = ssub.s32 32, 32
      %80 = vsyncadd [#allocation5], %s79
      %s82 = sshll.u32 [#allocation8], 4
      %s83 = int_to_ptr.vmem [resolvable:$true] %s82
      %85 = dma.vmem_to_hbm [thread:$0]  %s83, 32, %s3, [#allocation5]
    $region25: #{tpu_custom_call.1} parent=1 // pred_fallthru
      _
    // Predicated region
    $region26: #{tpu_custom_call.1} parent=1 // pred_check
      _
    $region27: #{tpu_custom_call.1} parent=1 // pred_check_branch
      %87 = sbr.rel (0) target = $region29
    $region28: #{tpu_custom_call.1} parent=1 // pred_region
      %88 = dma.done [#allocation5], 32
    $region29: #{tpu_custom_call.1} parent=1 // pred_fallthru
      _
    %89 = vsyncpa [#allocation4], 1
    %90 = vsyncpa [#allocation7], 1
    %91 = vsyncpa [#allocation5], 1

</llo_original>
